<compile_context>
chip_gen: v5e
topology: v5e:2x2
jax: 0.10.0
libtpu: 0.0.40
codegen_flags: <defaults>
</compile_context>

<pallas_src>
import math
import re
import functools

import jax
import jax.numpy as jnp
from jax import lax
from jax.experimental import pallas as pl
from jax.experimental.pallas import tpu as pltpu

LANE = 128
MAX_BLOCK_ROWS = 2048                 # 2048 x 128 x 4B = 1 MiB per f32 tile
VMEM_LIMIT_BYTES = 32 * 1024 * 1024   # explicit scoped-VMEM budget (safe on v5e/v6e/v7x)


def _tpu_generation():
    """Best-effort TPU generation (4, 5, 6, 7, ...). Returns 0 if unknown -> safe defaults."""
    try:
        kind = jax.devices()[0].device_kind  # e.g. "TPU v5 lite", "TPU v6e", ...
        m = re.search(r"v(\d+)", kind.lower())
        return int(m.group(1)) if m else 0
    except Exception:
        return 0


def _bounded_exp_math(x, *, decay_constant, inv_region, infinite_bound,
                      use_pl_recip, approx_recip):
    """Elementwise boundedExp math; used both inside the kernel and for the tiny JAX tail."""
    z = x * inv_region
    z2 = z * z
    if decay_constant == 0:
        zp = None
        den = 1.0 + z2                                  # 1 + z^2 ; numerator z^0 == 1
    else:
        zp = lax.integer_pow(z2, decay_constant)        # z^(2d)  (shared power chain)
        den = 1.0 + zp * z2                             # 1 + z^(2d+2)
    if use_pl_recip:
        inv_den = pl.reciprocal(den, approx=approx_recip)   # EUP path, next to exp
    else:
        inv_den = 1.0 / den
    exponent = inv_den if zp is None else zp * inv_den
    return (infinite_bound * x) * jnp.exp(exponent)


def _bounded_exp_kernel(x_ref, o_ref, *, decay_constant, inv_region, infinite_bound,
                        compute_dtype, use_pl_recip, approx_recip):
    x = x_ref[...].astype(compute_dtype)
    out = _bounded_exp_math(x, decay_constant=decay_constant, inv_region=inv_region,
                            infinite_bound=infinite_bound,
                            use_pl_recip=use_pl_recip, approx_recip=approx_recip)
    o_ref[...] = out.astype(o_ref.dtype)


def bounded_exp(x, decay_constant=0, nonlinearity_region=2,
                infinite_bound=math.exp(-0.5)):
    assert isinstance(decay_constant, int), "decayConstant must be an integer"
    assert 0 < abs(infinite_bound) <= 1, "infiniteBound magnitude must be in (0, 1]"
    assert 0 < nonlinearity_region, "nonLinearityRegion must be positive"
    assert 0 <= decay_constant, "decayConstant must be >= 0"

    orig_shape, orig_dtype = x.shape, x.dtype
    total = int(x.size)
    itemsize = jnp.dtype(orig_dtype).itemsize
    sub_min = max(8, 32 // itemsize)        # 8 f32 / 16 bf16 / 32 int8 sublane tiling
    align_unit = LANE * sub_min
    gen = _tpu_generation()

    low_precision_out = orig_dtype in (jnp.bfloat16, jnp.float16)
    # bf16 compute only where the VPU/EUP support it (v6e/v7x); f32 otherwise (v5e / unknown).
    compute_dtype = jnp.bfloat16 if (orig_dtype == jnp.bfloat16 and gen >= 6) else jnp.float32
    use_pl_recip = compute_dtype == jnp.float32
    approx_recip = bool(low_precision_out)   # ~1e-3 rel error invisible in bf16/f16 outputs

    inv_region = 1.0 / float(nonlinearity_region)
    infinite_bound = float(infinite_bound)

    x_flat = x.reshape(-1)                   # free for contiguous arrays
    bulk = (total // align_unit) * align_unit
    tail = total - bulk                      # < align_unit elements, plain-JAX epilogue

    pieces = []
    if bulk:
        rows = bulk // LANE                  # multiple of sub_min
        block_rows = min(MAX_BLOCK_ROWS, rows)
        # v7x: keep >= 2 grid steps so the "parallel" axis shards across both TensorCores.
        if gen >= 7 and rows >= 2 * sub_min:
            per_core = pl.cdiv(rows, 2)
            per_core = ((per_core + sub_min - 1) // sub_min) * sub_min
            block_rows = min(block_rows, per_core)

        x2d = (x_flat if tail == 0 else x_flat[:bulk]).reshape(rows, LANE)

        kernel = functools.partial(
            _bounded_exp_kernel,
            decay_constant=decay_constant,
            inv_region=inv_region,
            infinite_bound=infinite_bound,
            compute_dtype=compute_dtype,
            use_pl_recip=use_pl_recip,
            approx_recip=approx_recip,
        )

        cost = pl.CostEstimate(
            flops=(6 + 3 * decay_constant) * bulk,
            transcendentals=2 * bulk,                 # exp + reciprocal per element
            bytes_accessed=2 * bulk * itemsize,       # read + write of the processed bulk
        )

        out2d = pl.pallas_call(
            kernel,
            out_shape=jax.ShapeDtypeStruct((rows, LANE), orig_dtype),
            grid_spec=pltpu.PrefetchScalarGridSpec(
                num_scalar_prefetch=0,
                grid=(pl.cdiv(rows, block_rows),),    # partial final block masked by Pallas
                in_specs=[pl.BlockSpec((block_rows, LANE), lambda i: (i, 0))],
                out_specs=pl.BlockSpec((block_rows, LANE), lambda i: (i, 0)),
            ),
            compiler_params=pltpu.CompilerParams(
                dimension_semantics=("parallel",),
                vmem_limit_bytes=VMEM_LIMIT_BYTES,
            ),
            cost_estimate=cost,
        )(x2d)
        pieces.append(out2d.reshape(-1))

    if tail:
        # Tiny (< sub_min*128 element) tail: plain JAX, f32 compute, no pad/slice round trip.
        xt = x_flat[bulk:].astype(jnp.float32)
        ot = _bounded_exp_math(xt, decay_constant=decay_constant, inv_region=inv_region,
                               infinite_bound=infinite_bound,
                               use_pl_recip=False, approx_recip=False)
        pieces.append(ot.astype(orig_dtype))

    out_flat = pieces[0] if len(pieces) == 1 else jnp.concatenate(pieces)
    return out_flat.reshape(orig_shape)


def bounded_exp_ref(x, decay_constant=0, nonlinearity_region=2,
                    infinite_bound=math.exp(-0.5)):
    x = x.astype(jnp.float32)
    z = x / nonlinearity_region
    den = 1.0 + z ** (2 * decay_constant + 2)
    num = z ** (2 * decay_constant)
    return infinite_bound * x * jnp.exp(num / den)


if __name__ == "__main__":
    key = jax.random.PRNGKey(0)

    # Primary case: NCHW f32 (default module params) — kernel path, LANE-aligned.
    x = jax.random.normal(key, (2, 4, 16, 16), dtype=jnp.float32)
    out = jax.block_until_ready(bounded_exp(x))
    ref = bounded_exp_ref(x)
    assert out.shape == x.shape and out.dtype == x.dtype
    assert jnp.allclose(out, ref, atol=1e-5, rtol=1e-5), \
        float(jnp.max(jnp.abs(out - ref)))

    # Non-default params (exercises the shared power-chain numerator path).
    out2 = jax.block_until_ready(
        bounded_exp(x, decay_constant=1, nonlinearity_region=1.5, infinite_bound=0.9))
    ref2 = bounded_exp_ref(x, decay_constant=1, nonlinearity_region=1.5, infinite_bound=0.9)
    assert jnp.allclose(out2, ref2, atol=1e-5, rtol=1e-5), \
        float(jnp.max(jnp.abs(out2 - ref2)))

    # Odd flat size larger than one aligned tile (exercises kernel bulk + JAX tail + concat).
    x3 = jax.random.normal(jax.random.PRNGKey(1), (3, 5, 149), dtype=jnp.float32)
    out3 = jax.block_until_ready(bounded_exp(x3))
    ref3 = bounded_exp_ref(x3)
    assert out3.shape == x3.shape
    assert jnp.allclose(out3, ref3, atol=1e-5, rtol=1e-5), \
        float(jnp.max(jnp.abs(out3 - ref3)))

    # Tiny odd size (entirely handled by the plain-JAX epilogue).
    x4 = jax.random.normal(jax.random.PRNGKey(2), (3, 5, 7), dtype=jnp.float32)
    out4 = jax.block_until_ready(bounded_exp(x4))
    ref4 = bounded_exp_ref(x4)
    assert out4.shape == x4.shape
    assert jnp.allclose(out4, ref4, atol=1e-5, rtol=1e-5), \
        float(jnp.max(jnp.abs(out4 - ref4)))

    # bf16 storage (packed sublane tiling; bf16 compute on v6e/v7x, f32 compute on v5e).
    x_bf = x.astype(jnp.bfloat16)
    out_bf = jax.block_until_ready(bounded_exp(x_bf))
    ref_bf = bounded_exp_ref(x_bf)
    assert out_bf.dtype == jnp.bfloat16 and out_bf.shape == x_bf.shape
    assert jnp.allclose(out_bf.astype(jnp.float32), ref_bf, atol=3e-2, rtol=3e-2), \
        float(jnp.max(jnp.abs(out_bf.astype(jnp.float32) - ref_bf)))

    print("KERNEL_OK")
</pallas_src>

<mosaic_0001>
module attributes {stable_mosaic.version = 11 : i64} {
  func.func @_bounded_exp_kernel(%arg0: i32, %arg1: memref<16x128xf32, #tpu.memory_space<vmem>>, %arg2: memref<16x128xf32, #tpu.memory_space<vmem>>) attributes {dimension_semantics = [#tpu.dimension_semantics<parallel>], iteration_bounds = array<i64: 1>, scalar_prefetch = 0 : i64, scratch_operands = 0 : i64, tpu.core_type = #tpu.core_type<tc>, window_params = [{transform_indices = @transform_0, window_bounds = array<i64: 16, 128>}, {transform_indices = @transform_1, window_bounds = array<i64: 16, 128>}]} {
    %c0 = arith.constant 0 : index
    %c0_0 = arith.constant 0 : index
    %0 = vector.load %arg1[%c0, %c0_0] : memref<16x128xf32, #tpu.memory_space<vmem>>, vector<16x128xf32>
    %cst = arith.constant 5.000000e-01 : f32
    %1 = vector.broadcast %cst : f32 to vector<16x128xf32>
    %2 = arith.mulf %0, %1 : vector<16x128xf32>
    %3 = arith.mulf %2, %2 : vector<16x128xf32>
    %cst_1 = arith.constant 1.000000e+00 : f32
    %4 = vector.broadcast %cst_1 : f32 to vector<16x128xf32>
    %5 = arith.addf %4, %3 : vector<16x128xf32>
    %6 = tpu.reciprocal %5 : vector<16x128xf32> -> vector<16x128xf32>
    %cst_2 = arith.constant 0.606530666 : f32
    %7 = vector.broadcast %cst_2 : f32 to vector<16x128xf32>
    %8 = arith.mulf %7, %0 : vector<16x128xf32>
    %9 = math.exp %6 : vector<16x128xf32>
    %10 = arith.mulf %8, %9 : vector<16x128xf32>
    %c0_3 = arith.constant 0 : index
    %c0_4 = arith.constant 0 : index
    %11 = vector.load %arg2[%c0_3, %c0_4] : memref<16x128xf32, #tpu.memory_space<vmem>>, vector<16x128xf32>
    tpu.vector_store %arg2[%c0_3, %c0_4], %10 {strides = array<i32>} : memref<16x128xf32, #tpu.memory_space<vmem>>, vector<16x128xf32>,
    return
  }
  func.func @transform_0(%arg0: i32) -> (i32, i32) {
    %c0_i32 = arith.constant 0 : i32
    %c0_i32_0 = arith.constant 0 : i32
    return %arg0, %c0_i32 : i32, i32
  }
  func.func @transform_1(%arg0: i32) -> (i32, i32) {
    %c0_i32 = arith.constant 0 : i32
    %c0_i32_0 = arith.constant 0 : i32
    return %arg0, %c0_i32 : i32, i32
  }
}

</mosaic_0001>

<llo_original>
// kernel: tpu_custom_call.1
$region0: #{tpu_custom_call.1}
  #allocation0 [shape = 'u32[]', space=smem, size = 0x4, offset = 0x4, fixed_abs, tag = 'smem constant byte address 0x4 - core index']
  #allocation1 [shape = 'u32[72,128]{1,0:T(1,128)}', space=vmem, size = 0x9000, scoped, tag = 'internal scratch']
  %s0 = inlined_call_operand.hbm [shape: f32[16,128], index: 0, kind: input, shape index: {}]
  %s1 = inlined_call_operand.hbm [shape: f32[16,128], index: 1, kind: output, shape index: {}]
  %s2 = sld [smem:[#allocation0]]
  $region18: #{tpu_custom_call.1} parent=0
    _
  %s4 = ssub.s32 1, %s2
  %s5 = scalar_select 0, %s4, %s2
  $region1: #{tpu_custom_call.1} parent=0
    #allocation2 [shape = 'u8[8192]{0}', space=vmem, size = 0x2000, scoped, tag = 'input window, operand 0, single buffered']
    #allocation3 [shape = 's32[1]{0}', space=sflag, size = 0x4, scoped, tag = 'scoped memory for tpu_custom_call.1']
    #allocation4 [shape = 's32[1]{0}', space=sflag, size = 0x4, scoped, tag = 'scoped memory for tpu_custom_call.1']
    #allocation5 [shape = 'u8[8192]{0}', space=vmem, size = 0x2000, scoped, tag = 'output window, operand 0, single buffered']
    %6 = vsyncpa [#allocation3], 0
    %7 = vsyncpa [#allocation4], 0
    // Predicated region
    $region2: #{tpu_custom_call.1} parent=1 // pred_check
      _
    $region3: #{tpu_custom_call.1} parent=1 // pred_check_branch
      %9 = sbr.rel (0) target = $region5
    $region4: #{tpu_custom_call.1} parent=1 // pred_region
      %11 = vsyncadd [#allocation3], 0
      %s12 = sshll.u32 %s0, 4
      %s13 = int_to_ptr.hbm [resolvable:$true] %s12
      %s14 = sshll.u32 [#allocation2], 4
      %s15 = int_to_ptr.vmem [resolvable:$true] %s14
      %20 = dma.hbm_to_vmem [thread:$0]  %s13, 256, %s15, [#allocation3], 128, 128, 8
    $region5: #{tpu_custom_call.1} parent=1 // pred_fallthru
      _
    // Predicated region
    $region6: #{tpu_custom_call.1} parent=1 // pred_check
      _
    $region7: #{tpu_custom_call.1} parent=1 // pred_check_branch
      %22 = sbr.rel (0) target = $region9
    $region8: #{tpu_custom_call.1} parent=1 // pred_region
      %24 = dma.done [#allocation3], 256
    $region9: #{tpu_custom_call.1} parent=1 // pred_fallthru
      _
    %v25 = vld [vmem:[#allocation2] sm:$0xff]
    %v26 = vld [vmem:[#allocation2 + $0x8] sm:$0xff]
    %v27 = vmul.f32 %v25, 0.5
    %v28 = vmul.f32 %v26, 0.5
    %v29 = vmul.f32 %v27, %v27
    %v30 = vmul.f32 %v28, %v28
    %v31 = vadd.f32 %v29, 1.0
    %v32 = vadd.f32 %v30, 1.0
    %v33 = vrcp.pop %v31
    %v34 = vmul.f32 %v31, %v33
    %v35 = vsub.f32 1.0, %v34
    %v36 = vmul.f32 %v33, %v35
    %v37 = vadd.f32 %v33, %v36
    %vm38 = vweird.f32 %v31
    %vm39 = vweird.f32 %v33
    %vm40 = vmor %vm38, %vm39
    %v41 = vsel %vm40, %v33, %v37
    %v42 = vand.u32 2147483647, %v31
    %vm43 = vcmp.eq.f32.partialorder %v42, 8.507059e+37
    %v44 = vand.u32 %v31, 2147483648
    %v45 = vor.u32 1.1754944e-38, %v44
    %v46 = vsel %vm43, %v45, %v41
    %v47 = vrcp.pop %v32
    %v48 = vmul.f32 %v32, %v47
    %v49 = vsub.f32 1.0, %v48
    %v50 = vmul.f32 %v47, %v49
    %v51 = vadd.f32 %v47, %v50
    %vm52 = vweird.f32 %v32
    %vm53 = vweird.f32 %v47
    %vm54 = vmor %vm52, %vm53
    %v55 = vsel %vm54, %v47, %v51
    %v56 = vand.u32 2147483647, %v32
    %vm57 = vcmp.eq.f32.partialorder %v56, 8.507059e+37
    %v58 = vand.u32 %v32, 2147483648
    %v59 = vor.u32 1.1754944e-38, %v58
    %v60 = vsel %vm57, %v59, %v55
    %v61 = vmul.f32 %v25, 0.60653067
    %v62 = vmul.f32 %v26, 0.60653067
    %v63 = vmul.f32 %v46, 1.442695
    %v64 = vpow.pop %v63
    %v65 = vmul.f32 %v60, 1.442695
    %v66 = vpow.pop %v65
    %v67 = vmul.f32 %v61, %v64
    %v68 = vmul.f32 %v62, %v66
    %69 = vst [vmem:[#allocation5] sm:$0xff] %v67
    %70 = vst [vmem:[#allocation5 + $0x8] sm:$0xff] %v68
    // Predicated region
    $region10: #{tpu_custom_call.1} parent=1 // pred_check
      _
    $region11: #{tpu_custom_call.1} parent=1 // pred_check_branch
      %72 = sbr.rel (0) target = $region13
    $region12: #{tpu_custom_call.1} parent=1 // pred_region
      %74 = vsyncadd [#allocation4], 0
      %s75 = sshll.u32 [#allocation5], 4
      %s76 = int_to_ptr.vmem [resolvable:$true] %s75
      %s77 = sshll.u32 %s1, 4
      %s78 = int_to_ptr.hbm [resolvable:$true] %s77
      %83 = dma.vmem_to_hbm [thread:$0]  %s76, 256, %s78, [#allocation4], 128, 128, 8
    $region13: #{tpu_custom_call.1} parent=1 // pred_fallthru
      _
    // Predicated region
    $region14: #{tpu_custom_call.1} parent=1 // pred_check
      _
    $region15: #{tpu_custom_call.1} parent=1 // pred_check_branch
      %85 = sbr.rel (0) target = $region17
    $region16: #{tpu_custom_call.1} parent=1 // pred_region
      %87 = dma.done [#allocation4], 256
    $region17: #{tpu_custom_call.1} parent=1 // pred_fallthru
      _
    %88 = vsyncpa [#allocation3], 1
    %89 = vsyncpa [#allocation4], 1

</llo_original>
